<compile_context>
chip_gen: v5e
topology: v5e:2x2
jax: 0.10.0
libtpu: 0.0.40
codegen_flags: <defaults>
</compile_context>

<pallas_src>
import functools

import jax
import jax.numpy as jnp
from jax.experimental import pallas as pl
from jax.experimental.pallas import tpu as pltpu


def _softplus(x):
    return jnp.maximum(x, 0.0) + jnp.log(1.0 + jnp.exp(-jnp.abs(x)))


def _sigmoid(x):
    # Divide on the EUP (free slot) instead of the VALU.
    return pl.reciprocal(1.0 + jnp.exp(-x), approx=True)


def _softmax_last(x):
    x = x - jnp.max(x, axis=-1, keepdims=True)
    e = jnp.exp(x)
    return e * pl.reciprocal(jnp.sum(e, axis=-1, keepdims=True), approx=True)


def reader_kernel(ctrl_ref, mem_ref, wprev_ref, wkey_ref, bkey_ref, wrest_ref,
                  brest_ref, merge_ref, out_ref, wnew_ref, *, num_heads,
                  memory_width, shift_kernel_width):
    H, M, S = num_heads, memory_width, shift_kernel_width
    R = S + 3
    half = S // 2

    ctrl = ctrl_ref[...]            # (BB, C)
    mem = mem_ref[...]              # (BB, N, M)
    wprev = wprev_ref[...]          # (BB, H, N)

    # ---- fused per-head projections (MakeHead 'project' folded into the weights).
    # keys: one lane-clean (BB, H*M) MXU output tile; rest: small (BB, H*(S+3)) slab.
    keys = jnp.dot(ctrl, wkey_ref[...],
                   preferred_element_type=jnp.float32) + bkey_ref[...]           # (BB, H*M)
    rest = jnp.dot(ctrl, wrest_ref[...],
                   preferred_element_type=jnp.float32) + brest_ref[...]          # (BB, H*R)

    # Head-major contiguous slices -> (BB, H, .) regroups.
    key = jnp.concatenate(
        [keys[:, h * M:(h + 1) * M][:, None, :] for h in range(H)], axis=1)      # (BB, H, M)
    rest3 = jnp.concatenate(
        [rest[:, h * R:(h + 1) * R][:, None, :] for h in range(H)], axis=1)      # (BB, H, S+3)

    shift = _softmax_last(rest3[:, :, :S])                                        # (BB, H, S)
    beta = _softplus(rest3[:, :, S:S + 1])                                        # (BB, H, 1)
    gate = _sigmoid(rest3[:, :, S + 1:S + 2])                                     # (BB, H, 1)
    gamma = 1.0 + _softplus(rest3[:, :, S + 2:S + 3])                             # (BB, H, 1)

    # ---- content addressing: beta-sharpened cosine-similarity softmax (EUP rsqrt) --------
    # x / max(||x||, 1e-8)  ==  x * rsqrt(max(||x||^2, 1e-16))
    key_n = key * jax.lax.rsqrt(
        jnp.maximum(jnp.sum(key * key, axis=-1, keepdims=True), 1e-16))
    mem_n = mem * jax.lax.rsqrt(
        jnp.maximum(jnp.sum(mem * mem, axis=-1, keepdims=True), 1e-16))
    sim = jnp.einsum('bhm,bnm->bhn', key_n, mem_n,
                     preferred_element_type=jnp.float32)                          # (BB, H, N)
    w_c = _softmax_last(beta * sim)

    # ---- interpolation with prior read weights -------------------------------------------
    w_g = gate * w_c + (1.0 - gate) * wprev                                       # (BB, H, N)

    # ---- circular shift convolution: w_s[i] = sum_k s[k+half] * w_g[(i-k) mod N] ---------
    w_s = shift[:, :, half:half + 1] * w_g
    for j in range(S):
        if j == half:
            continue
        w_s = w_s + shift[:, :, j:j + 1] * jnp.roll(w_g, j - half, axis=-1)

    # ---- sharpening (final normalization kept exact: sum-to-1 contract) ------------------
    w_pow = jnp.exp(gamma * jnp.log(w_s + 1e-8))
    w_new = w_pow / jnp.sum(w_pow, axis=-1, keepdims=True)                        # (BB, H, N)
    wnew_ref[...] = w_new

    # ---- read + ReductiveMergeHeads('weighted_sum'); merge on the VPU --------------------
    read_h = jnp.einsum('bhn,bnm->bhm', w_new, mem,
                        preferred_element_type=jnp.float32)                       # (BB, H, M)
    out_ref[...] = jnp.sum(merge_ref[...] * read_h, axis=1)                       # (BB, M)


def _pick_batch_block(batch: int) -> int:
    # Large blocks amortize per-step overhead and fill MXU rows / sublanes;
    # keep >= 2 grid steps when the batch allows it so v7x can shard the
    # "parallel" batch axis across its two TensorCores (no-op on v5e/v6e).
    if batch <= 8:
        return batch
    bb = min(256, batch)
    if batch >= 16 and -(-batch // bb) < 2:
        bb = -(-batch // 2)
    return ((bb + 7) // 8) * 8          # sublane-align multi-block grids


def ntm_reader(control, memory, w_prev, params):
    control = control.astype(jnp.float32)
    memory = memory.astype(jnp.float32)
    w_prev = w_prev.astype(jnp.float32)

    B, C = control.shape
    _, N, M = memory.shape
    _, H, _ = w_prev.shape
    S = params["ws"].shape[-1]
    R = S + 3

    # ---- fold MakeHead('project') + all Indexer projections into two fused weights ------
    # key slab: head-major (C, H*M) -> one clean 128-lane MXU output tile.
    W_key = jnp.einsum("hcw,hwm->chm", params["wh"], params["wk"]).reshape(C, H * M)
    b_key = (jnp.einsum("hw,hwm->hm", params["bh"], params["wk"])
             + params["bk"]).reshape(1, H * M)
    # rest slab: head-major blocks [shift(S) | beta | gate | gamma], width S+3 per head.
    W_shift = jnp.einsum("hcw,hws->chs", params["wh"], params["ws"])              # (C, H, S)
    W_beta = jnp.einsum("hcw,hw->ch", params["wh"], params["wb"])[..., None]      # (C, H, 1)
    W_gate = jnp.einsum("hcw,hw->ch", params["wh"], params["wg"])[..., None]
    W_gamma = jnp.einsum("hcw,hw->ch", params["wh"], params["wgm"])[..., None]
    W_rest = jnp.concatenate([W_shift, W_beta, W_gate, W_gamma],
                             axis=-1).reshape(C, H * R)                           # (C, H*(S+3))
    b_shift = jnp.einsum("hw,hws->hs", params["bh"], params["ws"]) + params["bs"]
    b_beta = jnp.einsum("hw,hw->h", params["bh"], params["wb"])[:, None] + params["bb"]
    b_gate = jnp.einsum("hw,hw->h", params["bh"], params["wg"])[:, None] + params["bg"]
    b_gamma = jnp.einsum("hw,hw->h", params["bh"], params["wgm"])[:, None] + params["bgm"]
    b_rest = jnp.concatenate([b_shift, b_beta, b_gate, b_gamma],
                             axis=-1).reshape(1, H * R)
    merge3 = params["merge"].reshape(1, H, 1).astype(jnp.float32)                 # (1, H, 1)

    # ---- batch blocking: amortize per-grid-step overhead ---------------------------------
    BB = _pick_batch_block(B)
    B_pad = -(-B // BB) * BB
    if B_pad != B:
        pad = B_pad - B
        control = jnp.pad(control, ((0, pad), (0, 0)))
        memory = jnp.pad(memory, ((0, pad), (0, 0), (0, 0)))
        w_prev = jnp.pad(w_prev, ((0, pad), (0, 0), (0, 0)))

    kernel = functools.partial(reader_kernel, num_heads=H, memory_width=M,
                               shift_kernel_width=S)

    grid = (B_pad // BB,)
    in_specs = [
        pl.BlockSpec((BB, C), lambda i: (i, 0)),          # control
        pl.BlockSpec((BB, N, M), lambda i: (i, 0, 0)),    # memory
        pl.BlockSpec((BB, H, N), lambda i: (i, 0, 0)),    # prior read weights
        pl.BlockSpec((C, H * M), lambda i: (0, 0)),       # fused key projection weight
        pl.BlockSpec((1, H * M), lambda i: (0, 0)),       # fused key projection bias
        pl.BlockSpec((C, H * R), lambda i: (0, 0)),       # fused shift/beta/gate/gamma weight
        pl.BlockSpec((1, H * R), lambda i: (0, 0)),       # fused shift/beta/gate/gamma bias
        pl.BlockSpec((1, H, 1), lambda i: (0, 0, 0)),     # head-merge weights
    ]
    out_specs = (
        pl.BlockSpec((BB, M), lambda i: (i, 0)),          # lane-dense 2-D read result
        pl.BlockSpec((BB, H, N), lambda i: (i, 0, 0)),    # updated read weights
    )
    out_shape = (
        jax.ShapeDtypeStruct((B_pad, M), jnp.float32),
        jax.ShapeDtypeStruct((B_pad, H, N), jnp.float32),
    )

    out2, w_new = pl.pallas_call(
        kernel,
        grid_spec=pltpu.PrefetchScalarGridSpec(
            num_scalar_prefetch=0,
            grid=grid,
            in_specs=in_specs,
            out_specs=out_specs,
        ),
        out_shape=out_shape,
        compiler_params=pltpu.CompilerParams(
            dimension_semantics=("parallel",)),           # batch blocks are independent
    )(control, memory, w_prev, W_key, b_key, W_rest, b_rest, merge3)

    return out2[:B], w_new[:B]


if __name__ == "__main__":
    # Small shapes consistent with the module's forward pass.
    B, C, H, N, M, S = 2, 32, 4, 16, 32, 3
    HW = C // H  # MakeHead('project') head width = control_width // num_heads

    root = jax.random.PRNGKey(0)
    ks = jax.random.split(root, 16)
    sc = 0.1
    params = dict(
        wh=jax.random.normal(ks[0], (H, C, HW), jnp.float32) * sc,   # MakeHead per-head proj
        bh=jnp.zeros((H, HW), jnp.float32),
        wk=jax.random.normal(ks[1], (H, HW, M), jnp.float32) * sc,   # Indexer: key proj
        bk=jnp.zeros((H, M), jnp.float32),
        wb=jax.random.normal(ks[2], (H, HW), jnp.float32) * sc,      # Indexer: beta
        bb=jnp.zeros((H, 1), jnp.float32),
        wg=jax.random.normal(ks[3], (H, HW), jnp.float32) * sc,      # Indexer: gate
        bg=jnp.zeros((H, 1), jnp.float32),
        ws=jax.random.normal(ks[4], (H, HW, S), jnp.float32) * sc,   # Indexer: shift kernel
        bs=jnp.zeros((H, S), jnp.float32),
        wgm=jax.random.normal(ks[5], (H, HW), jnp.float32) * sc,     # Indexer: gamma
        bgm=jnp.zeros((H, 1), jnp.float32),
        merge=jax.random.normal(ks[6], (H, 1), jnp.float32) * sc + 1.0 / H,  # head merge weights
    )

    control = jax.random.normal(ks[7], (B, C), jnp.float32)
    memory = jax.random.normal(ks[8], (B, N, M), jnp.float32)
    w_prev = jax.nn.softmax(jax.random.normal(ks[9], (B, H, N), jnp.float32), axis=-1)
    # read_defaults would also be (B, H, N) but is unused (no reset head; see TODO above).

    out, w_new = ntm_reader(control, memory, w_prev, params)
    out, w_new = jax.block_until_ready((out, w_new))

    assert out.shape == (B, M) and w_new.shape == (B, H, N)
    assert bool(jnp.all(jnp.isfinite(out))) and bool(jnp.all(jnp.isfinite(w_new)))
    assert bool(jnp.allclose(jnp.sum(w_new, axis=-1), 1.0, atol=1e-4))
    print("KERNEL_OK")
</pallas_src>

<mosaic_0001>
module attributes {stable_mosaic.version = 11 : i64} {
  func.func @reader_kernel(%arg0: i32, %arg1: memref<2x32xf32, #tpu.memory_space<vmem>>, %arg2: memref<2x16x32xf32, #tpu.memory_space<vmem>>, %arg3: memref<2x4x16xf32, #tpu.memory_space<vmem>>, %arg4: memref<32x128xf32, #tpu.memory_space<vmem>>, %arg5: memref<1x128xf32, #tpu.memory_space<vmem>>, %arg6: memref<32x24xf32, #tpu.memory_space<vmem>>, %arg7: memref<1x24xf32, #tpu.memory_space<vmem>>, %arg8: memref<1x4x1xf32, #tpu.memory_space<vmem>>, %arg9: memref<2x32xf32, #tpu.memory_space<vmem>>, %arg10: memref<2x4x16xf32, #tpu.memory_space<vmem>>) attributes {dimension_semantics = [#tpu.dimension_semantics<parallel>], iteration_bounds = array<i64: 1>, scalar_prefetch = 0 : i64, scratch_operands = 0 : i64, tpu.core_type = #tpu.core_type<tc>, window_params = [{transform_indices = @transform_0, window_bounds = array<i64: 2, 32>}, {transform_indices = @transform_1, window_bounds = array<i64: 2, 16, 32>}, {transform_indices = @transform_2, window_bounds = array<i64: 2, 4, 16>}, {pipeline_mode = #tpu.pipeline_mode<synchronous>, transform_indices = @transform_3, window_bounds = array<i64: 32, 128>}, {pipeline_mode = #tpu.pipeline_mode<synchronous>, transform_indices = @transform_4, window_bounds = array<i64: 1, 128>}, {pipeline_mode = #tpu.pipeline_mode<synchronous>, transform_indices = @transform_5, window_bounds = array<i64: 32, 24>}, {pipeline_mode = #tpu.pipeline_mode<synchronous>, transform_indices = @transform_6, window_bounds = array<i64: 1, 24>}, {pipeline_mode = #tpu.pipeline_mode<synchronous>, transform_indices = @transform_7, window_bounds = array<i64: 1, 4, 1>}, {transform_indices = @transform_8, window_bounds = array<i64: 2, 32>}, {transform_indices = @transform_9, window_bounds = array<i64: 2, 4, 16>}]} {
    %c0 = arith.constant 0 : index
    %c0_0 = arith.constant 0 : index
    %0 = vector.load %arg1[%c0, %c0_0] : memref<2x32xf32, #tpu.memory_space<vmem>>, vector<2x32xf32>
    %c0_1 = arith.constant 0 : index
    %c0_2 = arith.constant 0 : index
    %c0_3 = arith.constant 0 : index
    %1 = vector.load %arg2[%c0_1, %c0_2, %c0_3] : memref<2x16x32xf32, #tpu.memory_space<vmem>>, vector<2x16x32xf32>
    %c0_4 = arith.constant 0 : index
    %c0_5 = arith.constant 0 : index
    %c0_6 = arith.constant 0 : index
    %2 = vector.load %arg3[%c0_4, %c0_5, %c0_6] : memref<2x4x16xf32, #tpu.memory_space<vmem>>, vector<2x4x16xf32>
    %c0_7 = arith.constant 0 : index
    %c0_8 = arith.constant 0 : index
    %3 = vector.load %arg4[%c0_7, %c0_8] : memref<32x128xf32, #tpu.memory_space<vmem>>, vector<32x128xf32>
    %cst = arith.constant dense<0.000000e+00> : vector<2x128xf32>
    %4 = tpu.matmul %0, %3, %cst {dimension_numbers = #tpu.dot_dimension_numbers<[1], [0], [0], [1], [0, 0, 1, 1], [], []>} : vector<2x32xf32>, vector<32x128xf32>, vector<2x128xf32> -> vector<2x128xf32>
    %c0_9 = arith.constant 0 : index
    %c0_10 = arith.constant 0 : index
    %5 = vector.load %arg5[%c0_9, %c0_10] : memref<1x128xf32, #tpu.memory_space<vmem>>, vector<1x128xf32>
    %6 = vector.broadcast %5 : vector<1x128xf32> to vector<2x128xf32>
    %7 = arith.addf %4, %6 : vector<2x128xf32>
    %c0_11 = arith.constant 0 : index
    %c0_12 = arith.constant 0 : index
    %8 = vector.load %arg6[%c0_11, %c0_12] : memref<32x24xf32, #tpu.memory_space<vmem>>, vector<32x24xf32>
    %cst_13 = arith.constant dense<0.000000e+00> : vector<2x24xf32>
    %9 = tpu.matmul %0, %8, %cst_13 {dimension_numbers = #tpu.dot_dimension_numbers<[1], [0], [0], [1], [0, 0, 1, 1], [], []>} : vector<2x32xf32>, vector<32x24xf32>, vector<2x24xf32> -> vector<2x24xf32>
    %c0_14 = arith.constant 0 : index
    %c0_15 = arith.constant 0 : index
    %10 = vector.load %arg7[%c0_14, %c0_15] : memref<1x24xf32, #tpu.memory_space<vmem>>, vector<1x24xf32>
    %11 = vector.broadcast %10 : vector<1x24xf32> to vector<2x24xf32>
    %12 = arith.addf %9, %11 : vector<2x24xf32>
    %13 = vector.extract_strided_slice %7 {offsets = [0, 0], sizes = [2, 32], strides = [1, 1]} : vector<2x128xf32> to vector<2x32xf32>
    %14 = vector.shape_cast %13 : vector<2x32xf32> to vector<2x1x32xf32>
    %15 = vector.extract_strided_slice %7 {offsets = [0, 32], sizes = [2, 32], strides = [1, 1]} : vector<2x128xf32> to vector<2x32xf32>
    %16 = vector.shape_cast %15 : vector<2x32xf32> to vector<2x1x32xf32>
    %17 = vector.extract_strided_slice %7 {offsets = [0, 64], sizes = [2, 32], strides = [1, 1]} : vector<2x128xf32> to vector<2x32xf32>
    %18 = vector.shape_cast %17 : vector<2x32xf32> to vector<2x1x32xf32>
    %19 = vector.extract_strided_slice %7 {offsets = [0, 96], sizes = [2, 32], strides = [1, 1]} : vector<2x128xf32> to vector<2x32xf32>
    %20 = vector.shape_cast %19 : vector<2x32xf32> to vector<2x1x32xf32>
    %21 = tpu.concatenate %14, %16, %18, %20 in 1 : vector<2x1x32xf32>, vector<2x1x32xf32>, vector<2x1x32xf32>, vector<2x1x32xf32> -> vector<2x4x32xf32>
    %22 = vector.extract_strided_slice %12 {offsets = [0, 0], sizes = [2, 6], strides = [1, 1]} : vector<2x24xf32> to vector<2x6xf32>
    %23 = vector.shape_cast %22 : vector<2x6xf32> to vector<2x1x6xf32>
    %24 = vector.extract_strided_slice %12 {offsets = [0, 6], sizes = [2, 6], strides = [1, 1]} : vector<2x24xf32> to vector<2x6xf32>
    %25 = vector.shape_cast %24 : vector<2x6xf32> to vector<2x1x6xf32>
    %26 = vector.extract_strided_slice %12 {offsets = [0, 12], sizes = [2, 6], strides = [1, 1]} : vector<2x24xf32> to vector<2x6xf32>
    %27 = vector.shape_cast %26 : vector<2x6xf32> to vector<2x1x6xf32>
    %28 = vector.extract_strided_slice %12 {offsets = [0, 18], sizes = [2, 6], strides = [1, 1]} : vector<2x24xf32> to vector<2x6xf32>
    %29 = vector.shape_cast %28 : vector<2x6xf32> to vector<2x1x6xf32>
    %30 = tpu.concatenate %23, %25, %27, %29 in 1 : vector<2x1x6xf32>, vector<2x1x6xf32>, vector<2x1x6xf32>, vector<2x1x6xf32> -> vector<2x4x6xf32>
    %31 = vector.extract_strided_slice %30 {offsets = [0, 0, 0], sizes = [2, 4, 3], strides = [1, 1, 1]} : vector<2x4x6xf32> to vector<2x4x3xf32>
    %cst_16 = arith.constant dense<0xFF800000> : vector<2x4xf32>
    %32 = vector.multi_reduction <maximumf>, %31, %cst_16 [2] : vector<2x4x3xf32> to vector<2x4xf32>
    %33 = vector.shape_cast %32 : vector<2x4xf32> to vector<2x4x1xf32>
    %34 = vector.broadcast %33 : vector<2x4x1xf32> to vector<2x4x3xf32>
    %35 = arith.subf %31, %34 : vector<2x4x3xf32>
    %36 = math.exp %35 : vector<2x4x3xf32>
    %cst_17 = arith.constant dense<0.000000e+00> : vector<2x4xf32>
    %37 = vector.multi_reduction <add>, %36, %cst_17 [2] : vector<2x4x3xf32> to vector<2x4xf32>
    %38 = vector.shape_cast %37 : vector<2x4xf32> to vector<2x4x1xf32>
    %39 = tpu.reciprocal %38 {approx = true} : vector<2x4x1xf32> -> vector<2x4x1xf32>
    %40 = vector.broadcast %39 : vector<2x4x1xf32> to vector<2x4x3xf32>
    %41 = arith.mulf %36, %40 : vector<2x4x3xf32>
    %42 = vector.extract_strided_slice %30 {offsets = [0, 0, 3], sizes = [2, 4, 1], strides = [1, 1, 1]} : vector<2x4x6xf32> to vector<2x4x1xf32>
    %cst_18 = arith.constant 0.000000e+00 : f32
    %43 = vector.broadcast %cst_18 : f32 to vector<2x4x1xf32>
    %44 = arith.maximumf %42, %43 : vector<2x4x1xf32>
    %45 = math.absf %42 : vector<2x4x1xf32>
    %cst_19 = arith.constant 0.000000e+00 : f32
    %46 = vector.broadcast %cst_19 : f32 to vector<2x4x1xf32>
    %47 = arith.subf %46, %45 : vector<2x4x1xf32>
    %48 = math.exp %47 : vector<2x4x1xf32>
    %cst_20 = arith.constant 1.000000e+00 : f32
    %49 = vector.broadcast %cst_20 : f32 to vector<2x4x1xf32>
    %50 = arith.addf %49, %48 : vector<2x4x1xf32>
    %51 = math.log %50 : vector<2x4x1xf32>
    %52 = arith.addf %44, %51 : vector<2x4x1xf32>
    %53 = vector.extract_strided_slice %30 {offsets = [0, 0, 4], sizes = [2, 4, 1], strides = [1, 1, 1]} : vector<2x4x6xf32> to vector<2x4x1xf32>
    %cst_21 = arith.constant 0.000000e+00 : f32
    %54 = vector.broadcast %cst_21 : f32 to vector<2x4x1xf32>
    %55 = arith.subf %54, %53 : vector<2x4x1xf32>
    %56 = math.exp %55 : vector<2x4x1xf32>
    %cst_22 = arith.constant 1.000000e+00 : f32
    %57 = vector.broadcast %cst_22 : f32 to vector<2x4x1xf32>
    %58 = arith.addf %57, %56 : vector<2x4x1xf32>
    %59 = tpu.reciprocal %58 {approx = true} : vector<2x4x1xf32> -> vector<2x4x1xf32>
    %60 = vector.extract_strided_slice %30 {offsets = [0, 0, 5], sizes = [2, 4, 1], strides = [1, 1, 1]} : vector<2x4x6xf32> to vector<2x4x1xf32>
    %cst_23 = arith.constant 0.000000e+00 : f32
    %61 = vector.broadcast %cst_23 : f32 to vector<2x4x1xf32>
    %62 = arith.maximumf %60, %61 : vector<2x4x1xf32>
    %63 = math.absf %60 : vector<2x4x1xf32>
    %cst_24 = arith.constant 0.000000e+00 : f32
    %64 = vector.broadcast %cst_24 : f32 to vector<2x4x1xf32>
    %65 = arith.subf %64, %63 : vector<2x4x1xf32>
    %66 = math.exp %65 : vector<2x4x1xf32>
    %cst_25 = arith.constant 1.000000e+00 : f32
    %67 = vector.broadcast %cst_25 : f32 to vector<2x4x1xf32>
    %68 = arith.addf %67, %66 : vector<2x4x1xf32>
    %69 = math.log %68 : vector<2x4x1xf32>
    %70 = arith.addf %62, %69 : vector<2x4x1xf32>
    %cst_26 = arith.constant 1.000000e+00 : f32
    %71 = vector.broadcast %cst_26 : f32 to vector<2x4x1xf32>
    %72 = arith.addf %71, %70 : vector<2x4x1xf32>
    %73 = arith.mulf %21, %21 : vector<2x4x32xf32>
    %cst_27 = arith.constant dense<0.000000e+00> : vector<2x4xf32>
    %74 = vector.multi_reduction <add>, %73, %cst_27 [2] : vector<2x4x32xf32> to vector<2x4xf32>
    %75 = vector.shape_cast %74 : vector<2x4xf32> to vector<2x4x1xf32>
    %cst_28 = arith.constant 1.000000e-16 : f32
    %76 = vector.broadcast %cst_28 : f32 to vector<2x4x1xf32>
    %77 = arith.maximumf %75, %76 : vector<2x4x1xf32>
    %78 = math.rsqrt %77 : vector<2x4x1xf32>
    %79 = vector.broadcast %78 : vector<2x4x1xf32> to vector<2x4x32xf32>
    %80 = arith.mulf %21, %79 : vector<2x4x32xf32>
    %81 = arith.mulf %1, %1 : vector<2x16x32xf32>
    %cst_29 = arith.constant dense<0.000000e+00> : vector<2x16xf32>
    %82 = vector.multi_reduction <add>, %81, %cst_29 [2] : vector<2x16x32xf32> to vector<2x16xf32>
    %83 = vector.shape_cast %82 : vector<2x16xf32> to vector<2x16x1xf32>
    %cst_30 = arith.constant 1.000000e-16 : f32
    %84 = vector.broadcast %cst_30 : f32 to vector<2x16x1xf32>
    %85 = arith.maximumf %83, %84 : vector<2x16x1xf32>
    %86 = math.rsqrt %85 : vector<2x16x1xf32>
    %87 = vector.broadcast %86 : vector<2x16x1xf32> to vector<2x16x32xf32>
    %88 = arith.mulf %1, %87 : vector<2x16x32xf32>
    "tpu.trace_start"() <{level = 10 : i32, message = "bhm,bnm->bhn"}> : () -> ()
    %cst_31 = arith.constant dense<0.000000e+00> : vector<2x4x16xf32>
    %89 = tpu.matmul %80, %88, %cst_31 {dimension_numbers = #tpu.dot_dimension_numbers<[2], [2], [1], [1], [0, 0, 0, 1, 1, 1], [0], [0]>} : vector<2x4x32xf32>, vector<2x16x32xf32>, vector<2x4x16xf32> -> vector<2x4x16xf32>
    "tpu.trace_stop"() : () -> ()
    %90 = vector.broadcast %52 : vector<2x4x1xf32> to vector<2x4x16xf32>
    %91 = arith.mulf %90, %89 : vector<2x4x16xf32>
    %cst_32 = arith.constant dense<0xFF800000> : vector<2x4xf32>
    %92 = vector.multi_reduction <maximumf>, %91, %cst_32 [2] : vector<2x4x16xf32> to vector<2x4xf32>
    %93 = vector.shape_cast %92 : vector<2x4xf32> to vector<2x4x1xf32>
    %94 = vector.broadcast %93 : vector<2x4x1xf32> to vector<2x4x16xf32>
    %95 = arith.subf %91, %94 : vector<2x4x16xf32>
    %96 = math.exp %95 : vector<2x4x16xf32>
    %cst_33 = arith.constant dense<0.000000e+00> : vector<2x4xf32>
    %97 = vector.multi_reduction <add>, %96, %cst_33 [2] : vector<2x4x16xf32> to vector<2x4xf32>
    %98 = vector.shape_cast %97 : vector<2x4xf32> to vector<2x4x1xf32>
    %99 = tpu.reciprocal %98 {approx = true} : vector<2x4x1xf32> -> vector<2x4x1xf32>
    %100 = vector.broadcast %99 : vector<2x4x1xf32> to vector<2x4x16xf32>
    %101 = arith.mulf %96, %100 : vector<2x4x16xf32>
    %102 = vector.broadcast %59 : vector<2x4x1xf32> to vector<2x4x16xf32>
    %103 = arith.mulf %102, %101 : vector<2x4x16xf32>
    %cst_34 = arith.constant 1.000000e+00 : f32
    %104 = vector.broadcast %cst_34 : f32 to vector<2x4x1xf32>
    %105 = arith.subf %104, %59 : vector<2x4x1xf32>
    %106 = vector.broadcast %105 : vector<2x4x1xf32> to vector<2x4x16xf32>
    %107 = arith.mulf %106, %2 : vector<2x4x16xf32>
    %108 = arith.addf %103, %107 : vector<2x4x16xf32>
    %109 = vector.extract_strided_slice %41 {offsets = [0, 0, 1], sizes = [2, 4, 1], strides = [1, 1, 1]} : vector<2x4x3xf32> to vector<2x4x1xf32>
    %110 = vector.broadcast %109 : vector<2x4x1xf32> to vector<2x4x16xf32>
    %111 = arith.mulf %110, %108 : vector<2x4x16xf32>
    %112 = vector.extract_strided_slice %41 {offsets = [0, 0, 0], sizes = [2, 4, 1], strides = [1, 1, 1]} : vector<2x4x3xf32> to vector<2x4x1xf32>
    %113 = vector.extract_strided_slice %108 {offsets = [0, 0, 1], sizes = [2, 4, 15], strides = [1, 1, 1]} : vector<2x4x16xf32> to vector<2x4x15xf32>
    %114 = vector.extract_strided_slice %108 {offsets = [0, 0, 0], sizes = [2, 4, 1], strides = [1, 1, 1]} : vector<2x4x16xf32> to vector<2x4x1xf32>
    %115 = tpu.concatenate %113, %114 in 2 : vector<2x4x15xf32>, vector<2x4x1xf32> -> vector<2x4x16xf32>
    %116 = vector.broadcast %112 : vector<2x4x1xf32> to vector<2x4x16xf32>
    %117 = arith.mulf %116, %115 : vector<2x4x16xf32>
    %118 = arith.addf %111, %117 : vector<2x4x16xf32>
    %119 = vector.extract_strided_slice %41 {offsets = [0, 0, 2], sizes = [2, 4, 1], strides = [1, 1, 1]} : vector<2x4x3xf32> to vector<2x4x1xf32>
    %120 = vector.extract_strided_slice %108 {offsets = [0, 0, 15], sizes = [2, 4, 1], strides = [1, 1, 1]} : vector<2x4x16xf32> to vector<2x4x1xf32>
    %121 = vector.extract_strided_slice %108 {offsets = [0, 0, 0], sizes = [2, 4, 15], strides = [1, 1, 1]} : vector<2x4x16xf32> to vector<2x4x15xf32>
    %122 = tpu.concatenate %120, %121 in 2 : vector<2x4x1xf32>, vector<2x4x15xf32> -> vector<2x4x16xf32>
    %123 = vector.broadcast %119 : vector<2x4x1xf32> to vector<2x4x16xf32>
    %124 = arith.mulf %123, %122 : vector<2x4x16xf32>
    %125 = arith.addf %118, %124 : vector<2x4x16xf32>
    %cst_35 = arith.constant 9.99999993E-9 : f32
    %126 = vector.broadcast %cst_35 : f32 to vector<2x4x16xf32>
    %127 = arith.addf %125, %126 : vector<2x4x16xf32>
    %128 = math.log %127 : vector<2x4x16xf32>
    %129 = vector.broadcast %72 : vector<2x4x1xf32> to vector<2x4x16xf32>
    %130 = arith.mulf %129, %128 : vector<2x4x16xf32>
    %131 = math.exp %130 : vector<2x4x16xf32>
    %cst_36 = arith.constant dense<0.000000e+00> : vector<2x4xf32>
    %132 = vector.multi_reduction <add>, %131, %cst_36 [2] : vector<2x4x16xf32> to vector<2x4xf32>
    %133 = vector.shape_cast %132 : vector<2x4xf32> to vector<2x4x1xf32>
    %134 = vector.broadcast %133 : vector<2x4x1xf32> to vector<2x4x16xf32>
    %135 = arith.divf %131, %134 : vector<2x4x16xf32>
    %c0_37 = arith.constant 0 : index
    %c0_38 = arith.constant 0 : index
    %c0_39 = arith.constant 0 : index
    %136 = vector.load %arg10[%c0_37, %c0_38, %c0_39] : memref<2x4x16xf32, #tpu.memory_space<vmem>>, vector<2x4x16xf32>
    tpu.vector_store %arg10[%c0_37, %c0_38, %c0_39], %135 {strides = array<i32>} : memref<2x4x16xf32, #tpu.memory_space<vmem>>, vector<2x4x16xf32>,
    "tpu.trace_start"() <{level = 10 : i32, message = "bhn,bnm->bhm"}> : () -> ()
    %cst_40 = arith.constant dense<0.000000e+00> : vector<2x4x32xf32>
    %137 = tpu.matmul %135, %1, %cst_40 {dimension_numbers = #tpu.dot_dimension_numbers<[2], [1], [1], [2], [0, 0, 0, 1, 1, 2], [0], [0]>} : vector<2x4x16xf32>, vector<2x16x32xf32>, vector<2x4x32xf32> -> vector<2x4x32xf32>
    "tpu.trace_stop"() : () -> ()
    %c0_41 = arith.constant 0 : index
    %c0_42 = arith.constant 0 : index
    %c0_43 = arith.constant 0 : index
    %138 = vector.load %arg8[%c0_41, %c0_42, %c0_43] : memref<1x4x1xf32, #tpu.memory_space<vmem>>, vector<1x4x1xf32>
    %139 = vector.broadcast %138 : vector<1x4x1xf32> to vector<2x4x32xf32>
    %140 = arith.mulf %139, %137 : vector<2x4x32xf32>
    %cst_44 = arith.constant dense<0.000000e+00> : vector<2x32xf32>
    %141 = vector.multi_reduction <add>, %140, %cst_44 [1] : vector<2x4x32xf32> to vector<2x32xf32>
    %c0_45 = arith.constant 0 : index
    %c0_46 = arith.constant 0 : index
    %142 = vector.load %arg9[%c0_45, %c0_46] : memref<2x32xf32, #tpu.memory_space<vmem>>, vector<2x32xf32>
    tpu.vector_store %arg9[%c0_45, %c0_46], %141 {strides = array<i32>} : memref<2x32xf32, #tpu.memory_space<vmem>>, vector<2x32xf32>,
    return
  }
  func.func @transform_0(%arg0: i32) -> (i32, i32) {
    %c0_i32 = arith.constant 0 : i32
    %c0_i32_0 = arith.constant 0 : i32
    return %arg0, %c0_i32 : i32, i32
  }
  func.func @transform_1(%arg0: i32) -> (i32, i32, i32) {
    %c0_i32 = arith.constant 0 : i32
    %c0_i32_0 = arith.constant 0 : i32
    %c0_i32_1 = arith.constant 0 : i32
    return %arg0, %c0_i32, %c0_i32_0 : i32, i32, i32
  }
  func.func @transform_2(%arg0: i32) -> (i32, i32, i32) {
    %c0_i32 = arith.constant 0 : i32
    %c0_i32_0 = arith.constant 0 : i32
    %c0_i32_1 = arith.constant 0 : i32
    return %arg0, %c0_i32, %c0_i32_0 : i32, i32, i32
  }
  func.func @transform_3(%arg0: i32) -> (i32, i32) {
    %c0_i32 = arith.constant 0 : i32
    %c0_i32_0 = arith.constant 0 : i32
    %c0_i32_1 = arith.constant 0 : i32
    return %c0_i32, %c0_i32_0 : i32, i32
  }
  func.func @transform_4(%arg0: i32) -> (i32, i32) {
    %c0_i32 = arith.constant 0 : i32
    %c0_i32_0 = arith.constant 0 : i32
    %c0_i32_1 = arith.constant 0 : i32
    return %c0_i32, %c0_i32_0 : i32, i32
  }
  func.func @transform_5(%arg0: i32) -> (i32, i32) {
    %c0_i32 = arith.constant 0 : i32
    %c0_i32_0 = arith.constant 0 : i32
    %c0_i32_1 = arith.constant 0 : i32
    return %c0_i32, %c0_i32_0 : i32, i32
  }
  func.func @transform_6(%arg0: i32) -> (i32, i32) {
    %c0_i32 = arith.constant 0 : i32
    %c0_i32_0 = arith.constant 0 : i32
    %c0_i32_1 = arith.constant 0 : i32
    return %c0_i32, %c0_i32_0 : i32, i32
  }
  func.func @transform_7(%arg0: i32) -> (i32, i32, i32) {
    %c0_i32 = arith.constant 0 : i32
    %c0_i32_0 = arith.constant 0 : i32
    %c0_i32_1 = arith.constant 0 : i32
    %c0_i32_2 = arith.constant 0 : i32
    return %c0_i32, %c0_i32_0, %c0_i32_1 : i32, i32, i32
  }
  func.func @transform_8(%arg0: i32) -> (i32, i32) {
    %c0_i32 = arith.constant 0 : i32
    %c0_i32_0 = arith.constant 0 : i32
    return %arg0, %c0_i32 : i32, i32
  }
  func.func @transform_9(%arg0: i32) -> (i32, i32, i32) {
    %c0_i32 = arith.constant 0 : i32
    %c0_i32_0 = arith.constant 0 : i32
    %c0_i32_1 = arith.constant 0 : i32
    return %arg0, %c0_i32, %c0_i32_0 : i32, i32, i32
  }
}

</mosaic_0001>

<llo_original>
// kernel: tpu_custom_call.1
$region0: #{tpu_custom_call.1}
  #allocation0 [shape = 'u32[]', space=smem, size = 0x4, offset = 0x4, fixed_abs, tag = 'smem constant byte address 0x4 - core index']
  #allocation1 [shape = 'u32[72,128]{1,0:T(1,128)}', space=vmem, size = 0x9000, scoped, tag = 'internal scratch']
  %s0 = inlined_call_operand.vmem [shape: f32[2,32], index: 0, kind: input, shape index: {}]
  %s1 = inlined_call_operand.vmem [shape: f32[2,16,32], index: 1, kind: input, shape index: {}]
  %s2 = inlined_call_operand.vmem [shape: f32[2,4,16], index: 2, kind: input, shape index: {}]
  %s3 = inlined_call_operand.hbm [shape: f32[32,128], index: 3, kind: input, shape index: {}]
  %s4 = inlined_call_operand.vmem [shape: f32[1,128], index: 4, kind: input, shape index: {}]
  %s5 = inlined_call_operand.vmem [shape: f32[32,24], index: 5, kind: input, shape index: {}]
  %s6 = inlined_call_operand.vmem [shape: f32[1,24], index: 6, kind: input, shape index: {}]
  %s7 = inlined_call_operand.vmem [shape: f32[1,4,1], index: 7, kind: input, shape index: {}]
  %s8 = inlined_call_operand.hbm [shape: f32[2,32], index: 8, kind: output, shape index: {0}]
  %s9 = inlined_call_operand.hbm [shape: f32[2,4,16], index: 9, kind: output, shape index: {1}]
  %10 = xla_tuple %s8, %s9
  %s11 = sld [smem:[#allocation0]]
  $region54: #{tpu_custom_call.1} parent=0
    _
  %s13 = ssub.s32 1, %s11
  %s14 = scalar_select 0, %s13, %s11
  $region1: #{tpu_custom_call.1} parent=0
    #allocation2 [shape = 'u8[16384]{0}', space=vmem, size = 0x4000, scoped, tag = 'input window, operand 3, single buffered']
    #allocation3 [shape = 's32[1]{0}', space=sflag, size = 0x4, scoped, tag = 'scoped memory for tpu_custom_call.1']
    #allocation4 [shape = 's32[1]{0}', space=sflag, size = 0x4, scoped, tag = 'scoped memory for tpu_custom_call.1']
    #allocation5 [shape = 'u8[1024]{0}', space=vmem, size = 0x400, scoped, tag = 'output window, operand 0, single buffered']
    #allocation6 [shape = 'u8[4096]{0}', space=vmem, size = 0x1000, scoped, tag = 'output window, operand 1, single buffered']
    #allocation7 [shape = 's32[1]{0}', space=sflag, size = 0x4, scoped, tag = 'scoped memory for tpu_custom_call.1']
    %15 = vsyncpa [#allocation3], 0
    %16 = vsyncpa [#allocation4], 0
    %17 = vsyncpa [#allocation7], 0
    // Predicated region
    $region2: #{tpu_custom_call.1} parent=1 // pred_check
      _
    $region3: #{tpu_custom_call.1} parent=1 // pred_check_branch
      %19 = sbr.rel (0) target = $region5
    $region4: #{tpu_custom_call.1} parent=1 // pred_region
      _
    $region5: #{tpu_custom_call.1} parent=1 // pred_fallthru
      _
    // Predicated region
    $region6: #{tpu_custom_call.1} parent=1 // pred_check
      _
    $region7: #{tpu_custom_call.1} parent=1 // pred_check_branch
      %21 = sbr.rel (0) target = $region9
    $region8: #{tpu_custom_call.1} parent=1 // pred_region
      _
    $region9: #{tpu_custom_call.1} parent=1 // pred_fallthru
      _
    // Predicated region
    $region10: #{tpu_custom_call.1} parent=1 // pred_check
      _
    $region11: #{tpu_custom_call.1} parent=1 // pred_check_branch
      %23 = sbr.rel (0) target = $region13
    $region12: #{tpu_custom_call.1} parent=1 // pred_region
      _
    $region13: #{tpu_custom_call.1} parent=1 // pred_fallthru
      _
    // Predicated region
    $region14: #{tpu_custom_call.1} parent=1 // pred_check
      _
    $region15: #{tpu_custom_call.1} parent=1 // pred_check_branch
      %25 = sbr.rel (0) target = $region17
    $region16: #{tpu_custom_call.1} parent=1 // pred_region
      %27 = vsyncadd [#allocation3], 0
      %s28 = sshll.u32 %s3, 4
      %s29 = int_to_ptr.hbm [resolvable:$true] %s28
      %s30 = sshll.u32 [#allocation2], 4
      %s31 = int_to_ptr.vmem [resolvable:$true] %s30
      %36 = dma.hbm_to_vmem [thread:$0]  %s29, 512, %s31, [#allocation3], 128, 128, 8
    $region17: #{tpu_custom_call.1} parent=1 // pred_fallthru
      _
    // Predicated region
    $region18: #{tpu_custom_call.1} parent=1 // pred_check
      _
    $region19: #{tpu_custom_call.1} parent=1 // pred_check_branch
      %38 = sbr.rel (0) target = $region21
    $region20: #{tpu_custom_call.1} parent=1 // pred_region
      _
    $region21: #{tpu_custom_call.1} parent=1 // pred_fallthru
      _
    // Predicated region
    $region22: #{tpu_custom_call.1} parent=1 // pred_check
      _
    $region23: #{tpu_custom_call.1} parent=1 // pred_check_branch
      %40 = sbr.rel (0) target = $region25
    $region24: #{tpu_custom_call.1} parent=1 // pred_region
      _
    $region25: #{tpu_custom_call.1} parent=1 // pred_fallthru
      _
    // Predicated region
    $region26: #{tpu_custom_call.1} parent=1 // pred_check
      _
    $region27: #{tpu_custom_call.1} parent=1 // pred_check_branch
      %42 = sbr.rel (0) target = $region29
    $region28: #{tpu_custom_call.1} parent=1 // pred_region
      _
    $region29: #{tpu_custom_call.1} parent=1 // pred_fallthru
      _
    // Predicated region
    $region30: #{tpu_custom_call.1} parent=1 // pred_check
      _
    $region31: #{tpu_custom_call.1} parent=1 // pred_check_branch
      %44 = sbr.rel (0) target = $region33
    $region32: #{tpu_custom_call.1} parent=1 // pred_region
      _
    $region33: #{tpu_custom_call.1} parent=1 // pred_fallthru
      _
    // Predicated region
    $region34: #{tpu_custom_call.1} parent=1 // pred_check
      _
    $region35: #{tpu_custom_call.1} parent=1 // pred_check_branch
      %46 = sbr.rel (0) target = $region37
    $region36: #{tpu_custom_call.1} parent=1 // pred_region
      %48 = dma.done [#allocation3], 512
    $region37: #{tpu_custom_call.1} parent=1 // pred_fallthru
      _
    %v49 = vld [vmem:[%s0] sm:$0x3]
    %v50 = vld [vmem:[%s1] sm:$0xff]
    %v51 = vld [vmem:[%s1 + $0x8] sm:$0xff]
    %v52 = vld [vmem:[%s1 + $0x10] sm:$0xff]
    %v53 = vld [vmem:[%s1 + $0x18] sm:$0xff]
    %v54 = vld [vmem:[%s2] sm:$0xf]
    %v55 = vld [vmem:[%s2 + $0x4] sm:$0xf]
    %v56 = vld [vmem:[#allocation2] sm:$0xff]
    %v57 = vld [vmem:[#allocation2 + $0x8] sm:$0xff]
    %v58 = vld [vmem:[#allocation2 + $0x10] sm:$0xff]
    %v59 = vld [vmem:[#allocation2 + $0x18] sm:$0xff]
    %v60 = vld [vmem:[%s4] sm:$0x1]
    %v62 = vperm.slane %v60, 0
    %vm64 = vcmask 261120
    %v66 = vsel %vm64, %v49, 0
    %68 = vmatpush.msra.mxu0 0.0
    %69 = vmatpush.msra.mxu0 0.0
    %70 = vmatpush.msra.mxu0 0.0
    %71 = vmatpush.msra.mxu0 0.0
    %72 = vmatpush.msra.mxu0 0.0
    %73 = vmatpush.msra.mxu0 0.0
    %74 = vmatpush.msra.mxu0 0.0
    %75 = vmatpush.msra.mxu0 0.0
    %76 = vmatpush.msra.mxu0 0.0
    %77 = vmatpush.msra.mxu0 0.0
    %78 = vmatpush.msra.mxu0 0.0
    %79 = vmatpush.msra.mxu0 0.0
    %80 = vmatpush.msra.mxu0 %v59
    %81 = vmatpush.msra.mxu0 %v58
    %82 = vmatpush.msra.mxu0 %v57
    %83 = vmatpush.msra.mxu0 %v56
    %84 = vmatmul.f32.gmra.mxu0 %v66
    %v85 = vpop.f32.mrf.mxu0
    %v86 = vadd.f32 %v62, %v85
    %87 = vdwg.mxu0
    %v88 = vld [vmem:[%s5] sm:$0xff]
    %v89 = vld [vmem:[%s5 + $0x8] sm:$0xff]
    %v90 = vld [vmem:[%s5 + $0x10] sm:$0xff]
    %v91 = vld [vmem:[%s5 + $0x18] sm:$0xff]
    %v92 = vld [vmem:[%s6] sm:$0x1]
    %v94 = vperm.slane %v92, 0
    %96 = vmatpush.msra.mxu0 0.0
    %97 = vmatpush.msra.mxu0 0.0
    %98 = vmatpush.msra.mxu0 0.0
    %99 = vmatpush.msra.mxu0 0.0
    %100 = vmatpush.msra.mxu0 0.0
    %101 = vmatpush.msra.mxu0 0.0
    %102 = vmatpush.msra.mxu0 0.0
    %103 = vmatpush.msra.mxu0 0.0
    %104 = vmatpush.msra.mxu0 0.0
    %105 = vmatpush.msra.mxu0 0.0
    %106 = vmatpush.msra.mxu0 0.0
    %107 = vmatpush.msra.mxu0 0.0
    %108 = vmatpush.msra.mxu0 %v91
    %109 = vmatpush.msra.mxu0 %v90
    %110 = vmatpush.msra.mxu0 %v89
    %111 = vmatpush.msra.mxu0 %v88
    %112 = vmatmul.f32.gmra.mxu0 %v66
    %v113 = vpop.f32.mrf.mxu0
    %v114 = vadd.f32 %v94, %v113
    %115 = vdwg.mxu0
    %v117 = vrot.slane %v86, 1
    %v119 = vperm.slane %v86, 0
    %v120 = vperm.slane %v117, 0
    %121 = vrot.lane.b32.xlu0 %v119, 96
    %v122 = vpop.permute.xlu0 %121
    %123 = vrot.lane.b32.xlu0 %v120, 96
    %v124 = vpop.permute.xlu0 %123
    %127 = vrot.lane.b32.xlu0 %v119, 64
    %v128 = vpop.permute.xlu0 %127
    %129 = vrot.lane.b32.xlu0 %v120, 64
    %v130 = vpop.permute.xlu0 %129
    %133 = vrot.lane.b32.xlu0 %v119, 32
    %v134 = vpop.permute.xlu0 %133
    %135 = vrot.lane.b32.xlu0 %v120, 32
    %v136 = vpop.permute.xlu0 %135
    %vm139 = vcmask 1040384
    %v140 = vsel %vm139, %v86, %v122
    %v141 = vsel %vm139, %v117, %v124
    %vm142 = vcmask 1041408
    %v143 = vsel %vm142, %v140, %v128
    %v144 = vsel %vm142, %v141, %v130
    %vm145 = vcmask 1042432
    %v146 = vsel %vm145, %v143, %v134
    %v147 = vsel %vm145, %v144, %v136
    %v149 = vrot.slane %v114, 1
    %v151 = vperm.slane %v114, 0
    %v152 = vperm.slane %v149, 0
    %153 = vrot.lane.b32.xlu0 %v151, 122
    %v154 = vpop.permute.xlu0 %153
    %155 = vrot.lane.b32.xlu0 %v152, 122
    %v156 = vpop.permute.xlu0 %155
    %159 = vrot.lane.b32.xlu0 %v151, 116
    %v160 = vpop.permute.xlu0 %159
    %161 = vrot.lane.b32.xlu0 %v152, 116
    %v162 = vpop.permute.xlu0 %161
    %165 = vrot.lane.b32.xlu0 %v151, 110
    %v166 = vpop.permute.xlu0 %165
    %167 = vrot.lane.b32.xlu0 %v152, 110
    %v168 = vpop.permute.xlu0 %167
    %v171 = vsel %vm139, %v114, %v154
    %v172 = vsel %vm139, %v149, %v156
    %v173 = vsel %vm142, %v171, %v160
    %v174 = vsel %vm142, %v172, %v162
    %v175 = vsel %vm145, %v173, %v166
    %v176 = vsel %vm145, %v174, %v168
    %vm177 = vcmask 19456
    %v178 = vsel %vm177, %v175, -inf
    %179 = vmax.xlane.f32.xlu0 %v178
    %v180 = vpop.xlane.xlu0 %179
    %v181 = vsel %vm177, %v176, -inf
    %182 = vmax.xlane.f32.xlu0 %v181
    %v183 = vpop.xlane.xlu0 %182
    %v184 = vsub.f32 %v175, %v180
    %v185 = vsub.f32 %v176, %v183
    %v186 = vmul.f32 %v184, 1.442695
    %v187 = vpow.pop %v186
    %v188 = vmul.f32 %v185, 1.442695
    %v189 = vpow.pop %v188
    %v190 = vsel %vm177, %v187, 0.0
    %191 = vadd.xlane.f32.xlu0 %v190
    %v192 = vpop.xlane.xlu0 %191
    %v193 = vsel %vm177, %v189, 0.0
    %194 = vadd.xlane.f32.xlu0 %v193
    %v195 = vpop.xlane.xlu0 %194
    %v196 = vrcp.pop %v192
    %v197 = vrcp.pop %v195
    %v198 = vmul.f32 %v187, %v196
    %v199 = vmul.f32 %v189, %v197
    %v200 = vmax.f32 %v175, 0.0
    %v201 = vmax.f32 %v176, 0.0
    %v202 = vand.u32 2147483647, %v175
    %v203 = vand.u32 2147483647, %v176
    %v204 = vsub.f32 0.0, %v202
    %v205 = vsub.f32 0.0, %v203
    %v206 = vmul.f32 %v204, 1.442695
    %v207 = vpow.pop %v206
    %v208 = vmul.f32 %v205, 1.442695
    %v209 = vpow.pop %v208
    %v210 = vadd.f32 %v207, 1.0
    %v211 = vadd.f32 %v209, 1.0
    %v212 = vlog2.pop %v210
    %v213 = vmul.f32 %v212, 0.6931472
    %v214 = vlog2.pop %v211
    %v215 = vmul.f32 %v214, 0.6931472
    %v216 = vadd.f32 %v200, %v213
    %v217 = vadd.f32 %v201, %v215
    %v218 = vsub.f32 0.0, %v175
    %v219 = vsub.f32 0.0, %v176
    %v220 = vmul.f32 %v218, 1.442695
    %v221 = vpow.pop %v220
    %v222 = vmul.f32 %v219, 1.442695
    %v223 = vpow.pop %v222
    %v224 = vadd.f32 %v221, 1.0
    %v225 = vadd.f32 %v223, 1.0
    %v226 = vrcp.pop %v224
    %v227 = vrcp.pop %v225
    %v228 = vadd.f32 %v216, 1.0
    %v229 = vadd.f32 %v217, 1.0
    %v230 = vmul.f32 %v146, %v146
    %v231 = vmul.f32 %v147, %v147
    %vm232 = vcmask 257024
    %v233 = vsel %vm232, %v230, 0.0
    %234 = vadd.xlane.f32.xlu0 %v233
    %v235 = vpop.xlane.xlu0 %234
    %v236 = vsel %vm232, %v231, 0.0
    %237 = vadd.xlane.f32.xlu0 %v236
    %v238 = vpop.xlane.xlu0 %237
    %v239 = vmax.f32 %v235, 1e-16
    %v240 = vmax.f32 %v238, 1e-16
    %v241 = vrsqrt.pop %v239
    %v242 = vmul.f32 %v241, %v239
    %v243 = vmul.f32 %v242, %v241
    %v244 = vmul.f32 0.5, %v243
    %v245 = vsub.f32 1.5, %v244
    %v246 = vmul.f32 %v241, %v245
    %vm247 = vweird.f32 %v239
    %vm248 = vweird.f32 %v241
    %vm249 = vmor %vm247, %vm248
    %v250 = vsel %vm249, %v241, %v246
    %v251 = vrsqrt.pop %v240
    %v252 = vmul.f32 %v251, %v240
    %v253 = vmul.f32 %v252, %v251
    %v254 = vmul.f32 0.5, %v253
    %v255 = vsub.f32 1.5, %v254
    %v256 = vmul.f32 %v251, %v255
    %vm257 = vweird.f32 %v240
    %vm258 = vweird.f32 %v251
    %vm259 = vmor %vm257, %vm258
    %v260 = vsel %vm259, %v251, %v256
    %v261 = vmul.f32 %v146, %v250
    %v262 = vmul.f32 %v147, %v260
    %v263 = vmul.f32 %v50, %v50
    %v264 = vmul.f32 %v51, %v51
    %v265 = vmul.f32 %v52, %v52
    %v266 = vmul.f32 %v53, %v53
    %v267 = vsel %vm64, %v263, 0.0
    %268 = vadd.xlane.f32.xlu0 %v267
    %v269 = vpop.xlane.xlu0 %268
    %v270 = vsel %vm64, %v264, 0.0
    %271 = vadd.xlane.f32.xlu0 %v270
    %v272 = vpop.xlane.xlu0 %271
    %v273 = vsel %vm64, %v265, 0.0
    %274 = vadd.xlane.f32.xlu0 %v273
    %v275 = vpop.xlane.xlu0 %274
    %v276 = vsel %vm64, %v266, 0.0
    %277 = vadd.xlane.f32.xlu0 %v276
    %v278 = vpop.xlane.xlu0 %277
    %v279 = vmax.f32 %v269, 1e-16
    %v280 = vmax.f32 %v272, 1e-16
    %v281 = vmax.f32 %v275, 1e-16
    %v282 = vmax.f32 %v278, 1e-16
    %v283 = vrsqrt.pop %v279
    %v284 = vmul.f32 %v283, %v279
    %v285 = vmul.f32 %v284, %v283
    %v286 = vmul.f32 0.5, %v285
    %v287 = vsub.f32 1.5, %v286
    %v288 = vmul.f32 %v283, %v287
    %vm289 = vweird.f32 %v279
    %vm290 = vweird.f32 %v283
    %vm291 = vmor %vm289, %vm290
    %v292 = vsel %vm291, %v283, %v288
    %v293 = vrsqrt.pop %v280
    %v294 = vmul.f32 %v293, %v280
    %v295 = vmul.f32 %v294, %v293
    %v296 = vmul.f32 0.5, %v295
    %v297 = vsub.f32 1.5, %v296
    %v298 = vmul.f32 %v293, %v297
    %vm299 = vweird.f32 %v280
    %vm300 = vweird.f32 %v293
    %vm301 = vmor %vm299, %vm300
    %v302 = vsel %vm301, %v293, %v298
    %v303 = vrsqrt.pop %v281
    %v304 = vmul.f32 %v303, %v281
    %v305 = vmul.f32 %v304, %v303
    %v306 = vmul.f32 0.5, %v305
    %v307 = vsub.f32 1.5, %v306
    %v308 = vmul.f32 %v303, %v307
    %vm309 = vweird.f32 %v281
    %vm310 = vweird.f32 %v303
    %vm311 = vmor %vm309, %vm310
    %v312 = vsel %vm311, %v303, %v308
    %v313 = vrsqrt.pop %v282
    %v314 = vmul.f32 %v313, %v282
    %v315 = vmul.f32 %v314, %v313
    %v316 = vmul.f32 0.5, %v315
    %v317 = vsub.f32 1.5, %v316
    %v318 = vmul.f32 %v313, %v317
    %vm319 = vweird.f32 %v282
    %vm320 = vweird.f32 %v313
    %vm321 = vmor %vm319, %vm320
    %v322 = vsel %vm321, %v313, %v318
    %v323 = vmul.f32 %v50, %v292
    %v324 = vmul.f32 %v51, %v302
    %v325 = vmul.f32 %v52, %v312
    %v326 = vmul.f32 %v53, %v322
    %v328 = vsel %vm64, %v261, 0
    %v331 = vsel %vm64, %v323, 0
    %v334 = vsel %vm64, %v324, 0
    %336 = vmatpush.xpose.msra.mxu0 0.0
    %337 = vmatpush.xpose.msra.mxu0 0.0
    %338 = vmatpush.xpose.msra.mxu0 0.0
    %339 = vmatpush.xpose.msra.mxu0 0.0
    %340 = vmatpush.xpose.msra.mxu0 0.0
    %341 = vmatpush.xpose.msra.mxu0 0.0
    %342 = vmatpush.xpose.msra.mxu0 0.0
    %343 = vmatpush.xpose.msra.mxu0 0.0
    %344 = vmatpush.xpose.msra.mxu0 0.0
    %345 = vmatpush.xpose.msra.mxu0 0.0
    %346 = vmatpush.xpose.msra.mxu0 0.0
    %347 = vmatpush.xpose.msra.mxu0 0.0
    %348 = vmatpush.xpose.msra.mxu0 0.0
    %349 = vmatpush.xpose.msra.mxu0 0.0
    %350 = vmatpush.xpose.msra.mxu0 %v334
    %351 = vmatpush.xpose.msra.mxu0 %v331
    %352 = vmatmul.f32.gmra.mxu0 %v328
    %v353 = vpop.f32.mrf.mxu0
    %v354 = vadd.f32 0.0, %v353
    %355 = vdwg.mxu0
    %v357 = vsel %vm64, %v262, 0
    %v360 = vsel %vm64, %v325, 0
    %v363 = vsel %vm64, %v326, 0
    %365 = vmatpush.xpose.msra.mxu0 0.0
    %366 = vmatpush.xpose.msra.mxu0 0.0
    %367 = vmatpush.xpose.msra.mxu0 0.0
    %368 = vmatpush.xpose.msra.mxu0 0.0
    %369 = vmatpush.xpose.msra.mxu0 0.0
    %370 = vmatpush.xpose.msra.mxu0 0.0
    %371 = vmatpush.xpose.msra.mxu0 0.0
    %372 = vmatpush.xpose.msra.mxu0 0.0
    %373 = vmatpush.xpose.msra.mxu0 0.0
    %374 = vmatpush.xpose.msra.mxu0 0.0
    %375 = vmatpush.xpose.msra.mxu0 0.0
    %376 = vmatpush.xpose.msra.mxu0 0.0
    %377 = vmatpush.xpose.msra.mxu0 0.0
    %378 = vmatpush.xpose.msra.mxu0 0.0
    %379 = vmatpush.xpose.msra.mxu0 %v363
    %380 = vmatpush.xpose.msra.mxu0 %v360
    %381 = vmatmul.f32.gmra.mxu0 %v357
    %v382 = vpop.f32.mrf.mxu0
    %v383 = vadd.f32 0.0, %v382
    %384 = vdwg.mxu0
    %386 = vset.pattern.permute.xlu0 3
    %387 = vperm.xlu0 %386, %v216
    %v388 = vpop.permute.xlu0 %387
    %391 = vset.pattern.permute.xlu0 3
    %392 = vperm.xlu0 %391, %v217
    %v393 = vpop.permute.xlu0 %392
    %v395 = vmul.f32 %v388, %v354
    %v396 = vmul.f32 %v393, %v383
    %vm397 = vcmask 125952
    %v398 = vsel %vm397, %v395, -inf
    %399 = vmax.xlane.f32.xlu0 %v398
    %v400 = vpop.xlane.xlu0 %399
    %v401 = vsel %vm397, %v396, -inf
    %402 = vmax.xlane.f32.xlu0 %v401
    %v403 = vpop.xlane.xlu0 %402
    %v404 = vsub.f32 %v395, %v400
    %v405 = vsub.f32 %v396, %v403
    %v406 = vmul.f32 %v404, 1.442695
    %v407 = vpow.pop %v406
    %v408 = vmul.f32 %v405, 1.442695
    %v409 = vpow.pop %v408
    %v410 = vsel %vm397, %v407, 0.0
    %411 = vadd.xlane.f32.xlu0 %v410
    %v412 = vpop.xlane.xlu0 %411
    %v413 = vsel %vm397, %v409, 0.0
    %414 = vadd.xlane.f32.xlu0 %v413
    %v415 = vpop.xlane.xlu0 %414
    %v416 = vrcp.pop %v412
    %v417 = vrcp.pop %v415
    %v418 = vmul.f32 %v407, %v416
    %v419 = vmul.f32 %v409, %v417
    %421 = vset.pattern.permute.xlu0 4
    %422 = vperm.xlu0 %421, %v226
    %v423 = vpop.permute.xlu0 %422
    %426 = vset.pattern.permute.xlu0 4
    %427 = vperm.xlu0 %426, %v227
    %v428 = vpop.permute.xlu0 %427
    %v430 = vmul.f32 %v423, %v418
    %v431 = vmul.f32 %v428, %v419
    %v432 = vsub.f32 1.0, %v226
    %v433 = vsub.f32 1.0, %v227
    %435 = vset.pattern.permute.xlu0 4
    %436 = vperm.xlu0 %435, %v432
    %v437 = vpop.permute.xlu0 %436
    %440 = vset.pattern.permute.xlu0 4
    %441 = vperm.xlu0 %440, %v433
    %v442 = vpop.permute.xlu0 %441
    %v444 = vmul.f32 %v437, %v54
    %v445 = vmul.f32 %v442, %v55
    %v446 = vadd.f32 %v430, %v444
    %v447 = vadd.f32 %v431, %v445
    %449 = vset.pattern.permute.xlu0 1
    %450 = vperm.xlu0 %449, %v198
    %v451 = vpop.permute.xlu0 %450
    %454 = vset.pattern.permute.xlu0 1
    %455 = vperm.xlu0 %454, %v199
    %v456 = vpop.permute.xlu0 %455
    %v458 = vmul.f32 %v451, %v446
    %v459 = vmul.f32 %v456, %v447
    %462 = vrot.lane.b32.xlu0 %v446, 127
    %v463 = vpop.permute.xlu0 %462
    %464 = vrot.lane.b32.xlu0 %v447, 127
    %v465 = vpop.permute.xlu0 %464
    %468 = vrot.lane.b32.xlu0 %v446, 15
    %v469 = vpop.permute.xlu0 %468
    %470 = vrot.lane.b32.xlu0 %v447, 15
    %v471 = vpop.permute.xlu0 %470
    %vm474 = vcmask 121856
    %v475 = vsel %vm474, %v463, %v469
    %v476 = vsel %vm474, %v465, %v471
    %477 = vset.pattern.permute.xlu0 0
    %478 = vperm.xlu0 %477, %v198
    %v479 = vpop.permute.xlu0 %478
    %481 = vset.pattern.permute.xlu0 0
    %482 = vperm.xlu0 %481, %v199
    %v483 = vpop.permute.xlu0 %482
    %v485 = vmul.f32 %v479, %v475
    %v486 = vmul.f32 %v483, %v476
    %v487 = vadd.f32 %v458, %v485
    %v488 = vadd.f32 %v459, %v486
    %489 = vrot.lane.b32.xlu0 %v446, 113
    %v490 = vpop.permute.xlu0 %489
    %491 = vrot.lane.b32.xlu0 %v447, 113
    %v492 = vpop.permute.xlu0 %491
    %495 = vrot.lane.b32.xlu0 %v446, 1
    %v496 = vpop.permute.xlu0 %495
    %497 = vrot.lane.b32.xlu0 %v447, 1
    %v498 = vpop.permute.xlu0 %497
    %vm501 = vcmask 7168
    %v502 = vsel %vm501, %v490, %v496
    %v503 = vsel %vm501, %v492, %v498
    %504 = vset.pattern.permute.xlu0 2
    %505 = vperm.xlu0 %504, %v198
    %v506 = vpop.permute.xlu0 %505
    %508 = vset.pattern.permute.xlu0 2
    %509 = vperm.xlu0 %508, %v199
    %v510 = vpop.permute.xlu0 %509
    %v512 = vmul.f32 %v506, %v502
    %v513 = vmul.f32 %v510, %v503
    %v514 = vadd.f32 %v487, %v512
    %v515 = vadd.f32 %v488, %v513
    %v516 = vadd.f32 %v514, 1e-08
    %v517 = vadd.f32 %v515, 1e-08
    %v518 = vlog2.pop %v516
    %v519 = vmul.f32 %v518, 0.6931472
    %v520 = vlog2.pop %v517
    %v521 = vmul.f32 %v520, 0.6931472
    %523 = vset.pattern.permute.xlu0 5
    %524 = vperm.xlu0 %523, %v228
    %v525 = vpop.permute.xlu0 %524
    %528 = vset.pattern.permute.xlu0 5
    %529 = vperm.xlu0 %528, %v229
    %v530 = vpop.permute.xlu0 %529
    %v532 = vmul.f32 %v525, %v519
    %v533 = vmul.f32 %v530, %v521
    %v534 = vmul.f32 %v532, 1.442695
    %v535 = vpow.pop %v534
    %v536 = vmul.f32 %v533, 1.442695
    %v537 = vpow.pop %v536
    %v538 = vsel %vm397, %v535, 0.0
    %539 = vadd.xlane.f32.xlu0 %v538
    %v540 = vpop.xlane.xlu0 %539
    %v541 = vsel %vm397, %v537, 0.0
    %542 = vadd.xlane.f32.xlu0 %v541
    %v543 = vpop.xlane.xlu0 %542
    %v544 = vrcp.pop %v540
    %v545 = vmul.f32 %v540, %v544
    %v546 = vsub.f32 1.0, %v545
    %v547 = vmul.f32 %v544, %v546
    %v548 = vadd.f32 %v544, %v547
    %vm549 = vweird.f32 %v540
    %vm550 = vweird.f32 %v544
    %vm551 = vmor %vm549, %vm550
    %v552 = vsel %vm551, %v544, %v548
    %v553 = vand.u32 2147483647, %v540
    %vm554 = vcmp.eq.f32.partialorder %v553, 8.507059e+37
    %v555 = vand.u32 %v540, 2147483648
    %v556 = vor.u32 1.1754944e-38, %v555
    %v557 = vsel %vm554, %v556, %v552
    %v558 = vmul.f32 %v535, %v557
    %v559 = vrcp.pop %v543
    %v560 = vmul.f32 %v543, %v559
    %v561 = vsub.f32 1.0, %v560
    %v562 = vmul.f32 %v559, %v561
    %v563 = vadd.f32 %v559, %v562
    %vm564 = vweird.f32 %v543
    %vm565 = vweird.f32 %v559
    %vm566 = vmor %vm564, %vm565
    %v567 = vsel %vm566, %v559, %v563
    %v568 = vand.u32 2147483647, %v543
    %vm569 = vcmp.eq.f32.partialorder %v568, 8.507059e+37
    %v570 = vand.u32 %v543, 2147483648
    %v571 = vor.u32 1.1754944e-38, %v570
    %v572 = vsel %vm569, %v571, %v567
    %v573 = vmul.f32 %v537, %v572
    %574 = vst.msk [vmem:[#allocation6] sm:$0xf] %vm397, %v558
    %575 = vst.msk [vmem:[#allocation6 + $0x4] sm:$0xf] %vm397, %v573
    %vm576 = vcmask 130048
    %v578 = vsel %vm576, %v558, 0
    %580 = vmatpush.msra.mxu0 0.0
    %581 = vmatpush.msra.mxu0 0.0
    %582 = vmatpush.msra.mxu0 0.0
    %583 = vmatpush.msra.mxu0 0.0
    %584 = vmatpush.msra.mxu0 0.0
    %585 = vmatpush.msra.mxu0 0.0
    %586 = vmatpush.msra.mxu0 0.0
    %587 = vmatpush.msra.mxu0 0.0
    %588 = vmatpush.msra.mxu0 0.0
    %589 = vmatpush.msra.mxu0 0.0
    %590 = vmatpush.msra.mxu0 0.0
    %591 = vmatpush.msra.mxu0 0.0
    %592 = vmatpush.msra.mxu0 0.0
    %593 = vmatpush.msra.mxu0 0.0
    %594 = vmatpush.msra.mxu0 %v51
    %595 = vmatpush.msra.mxu0 %v50
    %596 = vmatmul.f32.gmra.mxu0 %v578
    %v597 = vpop.f32.mrf.mxu0
    %v598 = vadd.f32 0.0, %v597
    %599 = vdwg.mxu0
    %v601 = vsel %vm576, %v573, 0
    %603 = vmatpush.msra.mxu0 0.0
    %604 = vmatpush.msra.mxu0 0.0
    %605 = vmatpush.msra.mxu0 0.0
    %606 = vmatpush.msra.mxu0 0.0
    %607 = vmatpush.msra.mxu0 0.0
    %608 = vmatpush.msra.mxu0 0.0
    %609 = vmatpush.msra.mxu0 0.0
    %610 = vmatpush.msra.mxu0 0.0
    %611 = vmatpush.msra.mxu0 0.0
    %612 = vmatpush.msra.mxu0 0.0
    %613 = vmatpush.msra.mxu0 0.0
    %614 = vmatpush.msra.mxu0 0.0
    %615 = vmatpush.msra.mxu0 0.0
    %616 = vmatpush.msra.mxu0 0.0
    %617 = vmatpush.msra.mxu0 %v53
    %618 = vmatpush.msra.mxu0 %v52
    %619 = vmatmul.f32.gmra.mxu0 %v601
    %v620 = vpop.f32.mrf.mxu0
    %v621 = vadd.f32 0.0, %v620
    %622 = vdwg.mxu0
    %v623 = vld [vmem:[%s7] sm:$0xf]
    %625 = vset.pattern.permute.xlu0 0
    %626 = vperm.xlu0 %625, %v623
    %v627 = vpop.permute.xlu0 %626
    %v629 = vmul.f32 %v627, %v598
    %v630 = vmul.f32 %v627, %v621
    %v631 = vsel %vm232, %v629, 0.0
    %v632 = vrot.slane %v631, 4
    %v633 = vadd.f32 %v631, %v632
    %v634 = vrot.slane %v633, 2
    %v635 = vadd.f32 %v633, %v634
    %v636 = vrot.slane %v635, 1
    %v637 = vadd.f32 %v635, %v636
    %v638 = vsel %vm232, %v630, 0.0
    %v639 = vrot.slane %v638, 4
    %v640 = vadd.f32 %v638, %v639
    %v641 = vrot.slane %v640, 2
    %v642 = vadd.f32 %v640, %v641
    %v643 = vrot.slane %v642, 1
    %v644 = vadd.f32 %v642, %v643
    %vm647 = vcmask 1041409
    %v648 = vsel %vm647, %v644, %v637
    %vm650 = vcmask 254976
    %651 = vst.msk [vmem:[#allocation5] sm:$0x3] %vm650, %v648
    // Predicated region
    $region38: #{tpu_custom_call.1} parent=1 // pred_check
      _
    $region39: #{tpu_custom_call.1} parent=1 // pred_check_branch
      %653 = sbr.rel (0) target = $region41
    $region40: #{tpu_custom_call.1} parent=1 // pred_region
      %655 = vsyncadd [#allocation4], 0
      %s657 = sshll.u32 [#allocation5], 4
      %s658 = int_to_ptr.vmem [resolvable:$true] %s657
      %s659 = sshll.u32 %s8, 4
      %s660 = int_to_ptr.hbm [resolvable:$true] %s659
      %662 = dma.vmem_to_hbm [thread:$0]  %s658, 32, %s660, [#allocation4]
    $region41: #{tpu_custom_call.1} parent=1 // pred_fallthru
      _
    // Predicated region
    $region42: #{tpu_custom_call.1} parent=1 // pred_check
      _
    $region43: #{tpu_custom_call.1} parent=1 // pred_check_branch
      %664 = sbr.rel (0) target = $region45
    $region44: #{tpu_custom_call.1} parent=1 // pred_region
      %666 = vsyncadd [#allocation7], 0
      %s667 = sshll.u32 [#allocation6], 4
      %s668 = int_to_ptr.vmem [resolvable:$true] %s667
      %s669 = sshll.u32 %s9, 4
      %s670 = int_to_ptr.hbm [resolvable:$true] %s669
      %675 = dma.vmem_to_hbm [thread:$0]  %s668, 128, %s670, [#allocation7], 64, 64, 4
    $region45: #{tpu_custom_call.1} parent=1 // pred_fallthru
      _
    // Predicated region
    $region46: #{tpu_custom_call.1} parent=1 // pred_check
      _
    $region47: #{tpu_custom_call.1} parent=1 // pred_check_branch
      %677 = sbr.rel (0) target = $region49
    $region48: #{tpu_custom_call.1} parent=1 // pred_region
      %679 = dma.done [#allocation4], 32
    $region49: #{tpu_custom_call.1} parent=1 // pred_fallthru
      _
    // Predicated region
    $region50: #{tpu_custom_call.1} parent=1 // pred_check
      _
    $region51: #{tpu_custom_call.1} parent=1 // pred_check_branch
      %681 = sbr.rel (0) target = $region53
    $region52: #{tpu_custom_call.1} parent=1 // pred_region
      %683 = dma.done [#allocation7], 128
    $region53: #{tpu_custom_call.1} parent=1 // pred_fallthru
      _
    %684 = vsyncpa [#allocation3], 1
    %685 = vsyncpa [#allocation4], 1
    %686 = vsyncpa [#allocation7], 1

</llo_original>
